<compile_context>
chip_gen: v7x
topology: tpu7x:2x2x1
jax: 0.10.0
libtpu: 0.0.40
codegen_flags: <defaults>
</compile_context>

<pallas_src>
import jax
import jax.numpy as jnp
from jax.experimental import pallas as pl
from jax.experimental.pallas import tpu as pltpu

SPIKE_THRESHOLD = 1.0          # sinabs IAF default
_LANES = 128
_SUBLANES = 8


def conv_iaf_kernel(w_ref, b_ref, x_ref, o_ref):
    """Fused Conv2d(2->4, k=2, s=2) as VPU broadcast-MAC + IAF over the channel axis.

    Layouts (all tiles are full (8,128)-tiled 2-D slabs):
      w_ref: (Cout*K,)            SMEM f32  -- 32 scalar weights, flat (c, ci, kh, kw) order
      b_ref: (Cout,)              SMEM f32  -- 4 scalar biases
      x_ref: (K, TILE_S, 128)     VMEM bf16 -- transposed im2col patches, M folded to (S,128)
      o_ref: (Cout, TILE_S, 128)  VMEM f32  -- spike counts; channel c doubles as IAF step c
    """
    k, tile_s, lanes = x_ref.shape
    cout = o_ref.shape[0]

    v = jnp.zeros((tile_s, lanes), jnp.float32)          # membrane potential, full-vreg slab
    for c in range(cout):                                # static unroll; Cout == 4 == T
        # conv output channel c: y = b[c] + sum_k w[c,k] * x[k]   (pure VPU, scalars from SMEM)
        y = jnp.full((tile_s, lanes), b_ref[c], jnp.float32)
        for kk in range(k):                              # static unroll; K == 8
            y = y + w_ref[c * k + kk] * x_ref[kk].astype(jnp.float32)
        # IAF: integrate -> MultiSpike -> MembraneSubtract
        v = v + y
        spk = jnp.maximum(jnp.floor(v / SPIKE_THRESHOLD), 0.0)   # /1.0 constant-folds
        v = v - spk * SPIKE_THRESHOLD
        o_ref[c] = spk                                   # unmasked lane-dense slab store


def _pick_tile_s(s_total, target_lanes):
    """Pick TILE_S: multiple of 8 dividing s_total, near target, prefer >= 2 grid steps."""
    target_s = max(_SUBLANES, target_lanes // _LANES)
    if s_total >= 2 * _SUBLANES:
        # keep at least 2 grid steps so the "parallel" axis can feed both v7x TensorCores
        target_s = min(target_s, s_total // 2)
    target_s = max(_SUBLANES, min(target_s, s_total))
    target_s = (target_s // _SUBLANES) * _SUBLANES
    for cand in range(target_s, _SUBLANES - 1, -_SUBLANES):
        if s_total % cand == 0:
            return cand
    return _SUBLANES


def dvsnet_forward(x, w, b, *, target_tile_lanes=1 << 16):
    """x: (N, 2, 16, 16) NCHW; w: (4, 2, 2, 2) OIHW; b: (4,). Returns (N, 4, 8, 8)."""
    n, cin, hh, ww = x.shape
    cout, cin_w, kh, kw = w.shape
    assert cin_w == cin
    oh, ow = hh // kh, ww // kw
    m = n * oh * ow
    k = cin * kh * kw

    # Pad M to a multiple of 8*128 so it folds to (S, 128) with S a multiple of 8
    # (handles any batch size, not just multiples of 128).
    m_pad = pl.cdiv(m, _LANES * _SUBLANES) * (_LANES * _SUBLANES)
    s_total = m_pad // _LANES

    # DVSLayer with pool=(1,1), crop=None, no flips, merge_polarities=False == identity.
    # DVS event counts are small non-negative integers -> exactly representable in bf16;
    # storing the patches as bf16 halves the kernel's HBM input read.
    x_dvs = x.astype(jnp.bfloat16)

    # im2col in transposed (K, M) layout so the large dim M sits in lanes, then fold M -> (S,128).
    # TODO(synk): for production sizes, fold this gather into the kernel / index_map (or use
    # allow_input_fusion on this operand) instead of materializing patches in HBM.
    patches_t = (
        x_dvs.reshape(n, cin, oh, kh, ow, kw)
             .transpose(1, 3, 5, 0, 2, 4)
             .reshape(k, m)
    )
    if m_pad != m:
        patches_t = jnp.pad(patches_t, ((0, 0), (0, m_pad - m)))
    patches_3d = patches_t.reshape(k, s_total, _LANES)

    w_flat = w.reshape(cout * k).astype(jnp.float32)     # flat 1-D SMEM scalars (min padding)
    b_vec = b.astype(jnp.float32)

    tile_s = _pick_tile_s(s_total, target_tile_lanes)
    grid = (s_total // tile_s,)

    # VMEM budget per buffer: (K*2B + Cout*4B) * tile_s * 128 = 32*tile_s*128 B; double-buffered
    # this stays ~4 MiB even at tile_s=512 -- comfortably under v7x's 64 MiB physical VMEM.
    out3 = pl.pallas_call(
        conv_iaf_kernel,
        out_shape=jax.ShapeDtypeStruct((cout, s_total, _LANES), jnp.float32),
        grid=grid,
        in_specs=[
            pl.BlockSpec(memory_space=pltpu.MemorySpace.SMEM),       # 32 scalar weights
            pl.BlockSpec(memory_space=pltpu.MemorySpace.SMEM),       # 4 scalar biases
            pl.BlockSpec((k, tile_s, _LANES), lambda i: (0, i, 0)),  # patch slab (K, TILE_S, 128)
        ],
        out_specs=pl.BlockSpec((cout, tile_s, _LANES), lambda i: (0, i, 0)),
        compiler_params=pltpu.CompilerParams(
            dimension_semantics=("parallel",),
            vmem_limit_bytes=32 * 1024 * 1024,
        ),
    )(w_flat, b_vec, patches_3d)

    out_t = out3.reshape(cout, m_pad)[:, :m]
    # (Cout, M) -> (N, Cout, OH, OW); kept for NCHW parity with the PyTorch module
    # (negligible here; fuse into the consumer for production sizes).
    return out_t.reshape(cout, n, oh, ow).transpose(1, 0, 2, 3)


def reference_forward(x, w, b):
    """Pure-JAX reference of the same semantics (conv + IAF over the channel axis)."""
    y = jax.lax.conv_general_dilated(
        x.astype(jnp.float32), w.astype(jnp.float32),
        window_strides=(2, 2), padding="VALID",
        dimension_numbers=("NCHW", "OIHW", "NCHW"),
        precision=jax.lax.Precision.HIGHEST)
    y = y + b.reshape(1, -1, 1, 1).astype(jnp.float32)
    v = jnp.zeros((y.shape[0],) + y.shape[2:], jnp.float32)
    outs = []
    for t in range(y.shape[1]):
        v = v + y[:, t]
        spk = jnp.maximum(jnp.floor(v / SPIKE_THRESHOLD), 0.0)
        v = v - spk * SPIKE_THRESHOLD
        outs.append(spk)
    return jnp.stack(outs, axis=1)


if __name__ == "__main__":
    key = jax.random.PRNGKey(0)
    kx, kw_, kb = jax.random.split(key, 3)

    # DVS-style input: small integer event counts, 2 polarity channels, 16x16.
    x = jax.random.randint(kx, (2, 2, 16, 16), 0, 3).astype(jnp.float32)

    # Deterministic synthetic Conv2d(2 -> 4, k=2, s=2) parameters.
    w = jax.random.normal(kw_, (4, 2, 2, 2), jnp.float32) * 0.5
    b = jax.random.normal(kb, (4,), jnp.float32) * 0.1

    out = jax.block_until_ready(dvsnet_forward(x, w, b))
    ref = jax.block_until_ready(reference_forward(x, w, b))

    assert out.shape == (2, 4, 8, 8), out.shape
    assert jnp.allclose(out, ref, atol=1e-5, rtol=1e-5), "mismatch vs reference"

    print("KERNEL_OK")
</pallas_src>

<mosaic_0001>
module attributes {stable_mosaic.version = 11 : i64} {
  func.func @conv_iaf_kernel(%arg0: i32, %arg1: memref<32xf32, #tpu.memory_space<smem>>, %arg2: memref<4xf32, #tpu.memory_space<smem>>, %arg3: memref<8x8x128xbf16, #tpu.memory_space<vmem>>, %arg4: memref<4x8x128xf32, #tpu.memory_space<vmem>>) attributes {dimension_semantics = [#tpu.dimension_semantics<parallel>], iteration_bounds = array<i64: 1>, scalar_prefetch = 0 : i64, scratch_operands = 0 : i64, tpu.core_type = #tpu.core_type<tc>, window_params = [{transform_indices = @transform_0, window_bounds = array<i64: 32>}, {transform_indices = @transform_1, window_bounds = array<i64: 4>}, {transform_indices = @transform_2, window_bounds = array<i64: 8, 8, 128>}, {transform_indices = @transform_3, window_bounds = array<i64: 4, 8, 128>}]} {
    %cst = arith.constant 0.000000e+00 : f32
    %0 = vector.broadcast %cst : f32 to vector<8x128xf32>
    %c0 = arith.constant 0 : index
    %1 = memref.load %arg2[%c0] : memref<4xf32, #tpu.memory_space<smem>>
    %2 = vector.broadcast %1 : f32 to vector<8x128xf32>
    %c0_0 = arith.constant 0 : index
    %3 = memref.load %arg1[%c0_0] : memref<32xf32, #tpu.memory_space<smem>>
    %c0_1 = arith.constant 0 : index
    %c0_2 = arith.constant 0 : index
    %c0_3 = arith.constant 0 : index
    %4 = vector.load %arg3[%c0_1, %c0_2, %c0_3] : memref<8x8x128xbf16, #tpu.memory_space<vmem>>, vector<1x8x128xbf16>
    %5 = vector.shape_cast %4 : vector<1x8x128xbf16> to vector<8x128xbf16>
    %6 = arith.extf %5 : vector<8x128xbf16> to vector<8x128xf32>
    %7 = vector.broadcast %3 : f32 to vector<8x128xf32>
    %8 = arith.mulf %7, %6 : vector<8x128xf32>
    %9 = arith.addf %2, %8 : vector<8x128xf32>
    %c1 = arith.constant 1 : index
    %10 = memref.load %arg1[%c1] : memref<32xf32, #tpu.memory_space<smem>>
    %c1_4 = arith.constant 1 : index
    %c0_5 = arith.constant 0 : index
    %c0_6 = arith.constant 0 : index
    %11 = vector.load %arg3[%c1_4, %c0_5, %c0_6] : memref<8x8x128xbf16, #tpu.memory_space<vmem>>, vector<1x8x128xbf16>
    %12 = vector.shape_cast %11 : vector<1x8x128xbf16> to vector<8x128xbf16>
    %13 = arith.extf %12 : vector<8x128xbf16> to vector<8x128xf32>
    %14 = vector.broadcast %10 : f32 to vector<8x128xf32>
    %15 = arith.mulf %14, %13 : vector<8x128xf32>
    %16 = arith.addf %9, %15 : vector<8x128xf32>
    %c2 = arith.constant 2 : index
    %17 = memref.load %arg1[%c2] : memref<32xf32, #tpu.memory_space<smem>>
    %c2_7 = arith.constant 2 : index
    %c0_8 = arith.constant 0 : index
    %c0_9 = arith.constant 0 : index
    %18 = vector.load %arg3[%c2_7, %c0_8, %c0_9] : memref<8x8x128xbf16, #tpu.memory_space<vmem>>, vector<1x8x128xbf16>
    %19 = vector.shape_cast %18 : vector<1x8x128xbf16> to vector<8x128xbf16>
    %20 = arith.extf %19 : vector<8x128xbf16> to vector<8x128xf32>
    %21 = vector.broadcast %17 : f32 to vector<8x128xf32>
    %22 = arith.mulf %21, %20 : vector<8x128xf32>
    %23 = arith.addf %16, %22 : vector<8x128xf32>
    %c3 = arith.constant 3 : index
    %24 = memref.load %arg1[%c3] : memref<32xf32, #tpu.memory_space<smem>>
    %c3_10 = arith.constant 3 : index
    %c0_11 = arith.constant 0 : index
    %c0_12 = arith.constant 0 : index
    %25 = vector.load %arg3[%c3_10, %c0_11, %c0_12] : memref<8x8x128xbf16, #tpu.memory_space<vmem>>, vector<1x8x128xbf16>
    %26 = vector.shape_cast %25 : vector<1x8x128xbf16> to vector<8x128xbf16>
    %27 = arith.extf %26 : vector<8x128xbf16> to vector<8x128xf32>
    %28 = vector.broadcast %24 : f32 to vector<8x128xf32>
    %29 = arith.mulf %28, %27 : vector<8x128xf32>
    %30 = arith.addf %23, %29 : vector<8x128xf32>
    %c4 = arith.constant 4 : index
    %31 = memref.load %arg1[%c4] : memref<32xf32, #tpu.memory_space<smem>>
    %c4_13 = arith.constant 4 : index
    %c0_14 = arith.constant 0 : index
    %c0_15 = arith.constant 0 : index
    %32 = vector.load %arg3[%c4_13, %c0_14, %c0_15] : memref<8x8x128xbf16, #tpu.memory_space<vmem>>, vector<1x8x128xbf16>
    %33 = vector.shape_cast %32 : vector<1x8x128xbf16> to vector<8x128xbf16>
    %34 = arith.extf %33 : vector<8x128xbf16> to vector<8x128xf32>
    %35 = vector.broadcast %31 : f32 to vector<8x128xf32>
    %36 = arith.mulf %35, %34 : vector<8x128xf32>
    %37 = arith.addf %30, %36 : vector<8x128xf32>
    %c5 = arith.constant 5 : index
    %38 = memref.load %arg1[%c5] : memref<32xf32, #tpu.memory_space<smem>>
    %c5_16 = arith.constant 5 : index
    %c0_17 = arith.constant 0 : index
    %c0_18 = arith.constant 0 : index
    %39 = vector.load %arg3[%c5_16, %c0_17, %c0_18] : memref<8x8x128xbf16, #tpu.memory_space<vmem>>, vector<1x8x128xbf16>
    %40 = vector.shape_cast %39 : vector<1x8x128xbf16> to vector<8x128xbf16>
    %41 = arith.extf %40 : vector<8x128xbf16> to vector<8x128xf32>
    %42 = vector.broadcast %38 : f32 to vector<8x128xf32>
    %43 = arith.mulf %42, %41 : vector<8x128xf32>
    %44 = arith.addf %37, %43 : vector<8x128xf32>
    %c6 = arith.constant 6 : index
    %45 = memref.load %arg1[%c6] : memref<32xf32, #tpu.memory_space<smem>>
    %c6_19 = arith.constant 6 : index
    %c0_20 = arith.constant 0 : index
    %c0_21 = arith.constant 0 : index
    %46 = vector.load %arg3[%c6_19, %c0_20, %c0_21] : memref<8x8x128xbf16, #tpu.memory_space<vmem>>, vector<1x8x128xbf16>
    %47 = vector.shape_cast %46 : vector<1x8x128xbf16> to vector<8x128xbf16>
    %48 = arith.extf %47 : vector<8x128xbf16> to vector<8x128xf32>
    %49 = vector.broadcast %45 : f32 to vector<8x128xf32>
    %50 = arith.mulf %49, %48 : vector<8x128xf32>
    %51 = arith.addf %44, %50 : vector<8x128xf32>
    %c7 = arith.constant 7 : index
    %52 = memref.load %arg1[%c7] : memref<32xf32, #tpu.memory_space<smem>>
    %c7_22 = arith.constant 7 : index
    %c0_23 = arith.constant 0 : index
    %c0_24 = arith.constant 0 : index
    %53 = vector.load %arg3[%c7_22, %c0_23, %c0_24] : memref<8x8x128xbf16, #tpu.memory_space<vmem>>, vector<1x8x128xbf16>
    %54 = vector.shape_cast %53 : vector<1x8x128xbf16> to vector<8x128xbf16>
    %55 = arith.extf %54 : vector<8x128xbf16> to vector<8x128xf32>
    %56 = vector.broadcast %52 : f32 to vector<8x128xf32>
    %57 = arith.mulf %56, %55 : vector<8x128xf32>
    %58 = arith.addf %51, %57 : vector<8x128xf32>
    %59 = arith.addf %0, %58 : vector<8x128xf32>
    %cst_25 = arith.constant 1.000000e+00 : f32
    %60 = vector.broadcast %cst_25 : f32 to vector<8x128xf32>
    %61 = arith.divf %59, %60 : vector<8x128xf32>
    %62 = math.floor %61 : vector<8x128xf32>
    %cst_26 = arith.constant 0.000000e+00 : f32
    %63 = vector.broadcast %cst_26 : f32 to vector<8x128xf32>
    %64 = arith.maximumf %62, %63 : vector<8x128xf32>
    %cst_27 = arith.constant 1.000000e+00 : f32
    %65 = vector.broadcast %cst_27 : f32 to vector<8x128xf32>
    %66 = arith.mulf %64, %65 : vector<8x128xf32>
    %67 = arith.subf %59, %66 : vector<8x128xf32>
    %c0_28 = arith.constant 0 : index
    %c0_29 = arith.constant 0 : index
    %c0_30 = arith.constant 0 : index
    %68 = vector.load %arg4[%c0_28, %c0_29, %c0_30] : memref<4x8x128xf32, #tpu.memory_space<vmem>>, vector<1x8x128xf32>
    %69 = vector.shape_cast %68 : vector<1x8x128xf32> to vector<8x128xf32>
    %70 = vector.shape_cast %64 : vector<8x128xf32> to vector<1x8x128xf32>
    tpu.vector_store %arg4[%c0_28, %c0_29, %c0_30], %70 {strides = array<i32>} : memref<4x8x128xf32, #tpu.memory_space<vmem>>, vector<1x8x128xf32>,
    %c1_31 = arith.constant 1 : index
    %71 = memref.load %arg2[%c1_31] : memref<4xf32, #tpu.memory_space<smem>>
    %72 = vector.broadcast %71 : f32 to vector<8x128xf32>
    %c8 = arith.constant 8 : index
    %73 = memref.load %arg1[%c8] : memref<32xf32, #tpu.memory_space<smem>>
    %c0_32 = arith.constant 0 : index
    %c0_33 = arith.constant 0 : index
    %c0_34 = arith.constant 0 : index
    %74 = vector.load %arg3[%c0_32, %c0_33, %c0_34] : memref<8x8x128xbf16, #tpu.memory_space<vmem>>, vector<1x8x128xbf16>
    %75 = vector.shape_cast %74 : vector<1x8x128xbf16> to vector<8x128xbf16>
    %76 = arith.extf %75 : vector<8x128xbf16> to vector<8x128xf32>
    %77 = vector.broadcast %73 : f32 to vector<8x128xf32>
    %78 = arith.mulf %77, %76 : vector<8x128xf32>
    %79 = arith.addf %72, %78 : vector<8x128xf32>
    %c9 = arith.constant 9 : index
    %80 = memref.load %arg1[%c9] : memref<32xf32, #tpu.memory_space<smem>>
    %c1_35 = arith.constant 1 : index
    %c0_36 = arith.constant 0 : index
    %c0_37 = arith.constant 0 : index
    %81 = vector.load %arg3[%c1_35, %c0_36, %c0_37] : memref<8x8x128xbf16, #tpu.memory_space<vmem>>, vector<1x8x128xbf16>
    %82 = vector.shape_cast %81 : vector<1x8x128xbf16> to vector<8x128xbf16>
    %83 = arith.extf %82 : vector<8x128xbf16> to vector<8x128xf32>
    %84 = vector.broadcast %80 : f32 to vector<8x128xf32>
    %85 = arith.mulf %84, %83 : vector<8x128xf32>
    %86 = arith.addf %79, %85 : vector<8x128xf32>
    %c10 = arith.constant 10 : index
    %87 = memref.load %arg1[%c10] : memref<32xf32, #tpu.memory_space<smem>>
    %c2_38 = arith.constant 2 : index
    %c0_39 = arith.constant 0 : index
    %c0_40 = arith.constant 0 : index
    %88 = vector.load %arg3[%c2_38, %c0_39, %c0_40] : memref<8x8x128xbf16, #tpu.memory_space<vmem>>, vector<1x8x128xbf16>
    %89 = vector.shape_cast %88 : vector<1x8x128xbf16> to vector<8x128xbf16>
    %90 = arith.extf %89 : vector<8x128xbf16> to vector<8x128xf32>
    %91 = vector.broadcast %87 : f32 to vector<8x128xf32>
    %92 = arith.mulf %91, %90 : vector<8x128xf32>
    %93 = arith.addf %86, %92 : vector<8x128xf32>
    %c11 = arith.constant 11 : index
    %94 = memref.load %arg1[%c11] : memref<32xf32, #tpu.memory_space<smem>>
    %c3_41 = arith.constant 3 : index
    %c0_42 = arith.constant 0 : index
    %c0_43 = arith.constant 0 : index
    %95 = vector.load %arg3[%c3_41, %c0_42, %c0_43] : memref<8x8x128xbf16, #tpu.memory_space<vmem>>, vector<1x8x128xbf16>
    %96 = vector.shape_cast %95 : vector<1x8x128xbf16> to vector<8x128xbf16>
    %97 = arith.extf %96 : vector<8x128xbf16> to vector<8x128xf32>
    %98 = vector.broadcast %94 : f32 to vector<8x128xf32>
    %99 = arith.mulf %98, %97 : vector<8x128xf32>
    %100 = arith.addf %93, %99 : vector<8x128xf32>
    %c12 = arith.constant 12 : index
    %101 = memref.load %arg1[%c12] : memref<32xf32, #tpu.memory_space<smem>>
    %c4_44 = arith.constant 4 : index
    %c0_45 = arith.constant 0 : index
    %c0_46 = arith.constant 0 : index
    %102 = vector.load %arg3[%c4_44, %c0_45, %c0_46] : memref<8x8x128xbf16, #tpu.memory_space<vmem>>, vector<1x8x128xbf16>
    %103 = vector.shape_cast %102 : vector<1x8x128xbf16> to vector<8x128xbf16>
    %104 = arith.extf %103 : vector<8x128xbf16> to vector<8x128xf32>
    %105 = vector.broadcast %101 : f32 to vector<8x128xf32>
    %106 = arith.mulf %105, %104 : vector<8x128xf32>
    %107 = arith.addf %100, %106 : vector<8x128xf32>
    %c13 = arith.constant 13 : index
    %108 = memref.load %arg1[%c13] : memref<32xf32, #tpu.memory_space<smem>>
    %c5_47 = arith.constant 5 : index
    %c0_48 = arith.constant 0 : index
    %c0_49 = arith.constant 0 : index
    %109 = vector.load %arg3[%c5_47, %c0_48, %c0_49] : memref<8x8x128xbf16, #tpu.memory_space<vmem>>, vector<1x8x128xbf16>
    %110 = vector.shape_cast %109 : vector<1x8x128xbf16> to vector<8x128xbf16>
    %111 = arith.extf %110 : vector<8x128xbf16> to vector<8x128xf32>
    %112 = vector.broadcast %108 : f32 to vector<8x128xf32>
    %113 = arith.mulf %112, %111 : vector<8x128xf32>
    %114 = arith.addf %107, %113 : vector<8x128xf32>
    %c14 = arith.constant 14 : index
    %115 = memref.load %arg1[%c14] : memref<32xf32, #tpu.memory_space<smem>>
    %c6_50 = arith.constant 6 : index
    %c0_51 = arith.constant 0 : index
    %c0_52 = arith.constant 0 : index
    %116 = vector.load %arg3[%c6_50, %c0_51, %c0_52] : memref<8x8x128xbf16, #tpu.memory_space<vmem>>, vector<1x8x128xbf16>
    %117 = vector.shape_cast %116 : vector<1x8x128xbf16> to vector<8x128xbf16>
    %118 = arith.extf %117 : vector<8x128xbf16> to vector<8x128xf32>
    %119 = vector.broadcast %115 : f32 to vector<8x128xf32>
    %120 = arith.mulf %119, %118 : vector<8x128xf32>
    %121 = arith.addf %114, %120 : vector<8x128xf32>
    %c15 = arith.constant 15 : index
    %122 = memref.load %arg1[%c15] : memref<32xf32, #tpu.memory_space<smem>>
    %c7_53 = arith.constant 7 : index
    %c0_54 = arith.constant 0 : index
    %c0_55 = arith.constant 0 : index
    %123 = vector.load %arg3[%c7_53, %c0_54, %c0_55] : memref<8x8x128xbf16, #tpu.memory_space<vmem>>, vector<1x8x128xbf16>
    %124 = vector.shape_cast %123 : vector<1x8x128xbf16> to vector<8x128xbf16>
    %125 = arith.extf %124 : vector<8x128xbf16> to vector<8x128xf32>
    %126 = vector.broadcast %122 : f32 to vector<8x128xf32>
    %127 = arith.mulf %126, %125 : vector<8x128xf32>
    %128 = arith.addf %121, %127 : vector<8x128xf32>
    %129 = arith.addf %67, %128 : vector<8x128xf32>
    %cst_56 = arith.constant 1.000000e+00 : f32
    %130 = vector.broadcast %cst_56 : f32 to vector<8x128xf32>
    %131 = arith.divf %129, %130 : vector<8x128xf32>
    %132 = math.floor %131 : vector<8x128xf32>
    %cst_57 = arith.constant 0.000000e+00 : f32
    %133 = vector.broadcast %cst_57 : f32 to vector<8x128xf32>
    %134 = arith.maximumf %132, %133 : vector<8x128xf32>
    %cst_58 = arith.constant 1.000000e+00 : f32
    %135 = vector.broadcast %cst_58 : f32 to vector<8x128xf32>
    %136 = arith.mulf %134, %135 : vector<8x128xf32>
    %137 = arith.subf %129, %136 : vector<8x128xf32>
    %c1_59 = arith.constant 1 : index
    %c0_60 = arith.constant 0 : index
    %c0_61 = arith.constant 0 : index
    %138 = vector.load %arg4[%c1_59, %c0_60, %c0_61] : memref<4x8x128xf32, #tpu.memory_space<vmem>>, vector<1x8x128xf32>
    %139 = vector.shape_cast %138 : vector<1x8x128xf32> to vector<8x128xf32>
    %140 = vector.shape_cast %134 : vector<8x128xf32> to vector<1x8x128xf32>
    tpu.vector_store %arg4[%c1_59, %c0_60, %c0_61], %140 {strides = array<i32>} : memref<4x8x128xf32, #tpu.memory_space<vmem>>, vector<1x8x128xf32>,
    %c2_62 = arith.constant 2 : index
    %141 = memref.load %arg2[%c2_62] : memref<4xf32, #tpu.memory_space<smem>>
    %142 = vector.broadcast %141 : f32 to vector<8x128xf32>
    %c16 = arith.constant 16 : index
    %143 = memref.load %arg1[%c16] : memref<32xf32, #tpu.memory_space<smem>>
    %c0_63 = arith.constant 0 : index
    %c0_64 = arith.constant 0 : index
    %c0_65 = arith.constant 0 : index
    %144 = vector.load %arg3[%c0_63, %c0_64, %c0_65] : memref<8x8x128xbf16, #tpu.memory_space<vmem>>, vector<1x8x128xbf16>
    %145 = vector.shape_cast %144 : vector<1x8x128xbf16> to vector<8x128xbf16>
    %146 = arith.extf %145 : vector<8x128xbf16> to vector<8x128xf32>
    %147 = vector.broadcast %143 : f32 to vector<8x128xf32>
    %148 = arith.mulf %147, %146 : vector<8x128xf32>
    %149 = arith.addf %142, %148 : vector<8x128xf32>
    %c17 = arith.constant 17 : index
    %150 = memref.load %arg1[%c17] : memref<32xf32, #tpu.memory_space<smem>>
    %c1_66 = arith.constant 1 : index
    %c0_67 = arith.constant 0 : index
    %c0_68 = arith.constant 0 : index
    %151 = vector.load %arg3[%c1_66, %c0_67, %c0_68] : memref<8x8x128xbf16, #tpu.memory_space<vmem>>, vector<1x8x128xbf16>
    %152 = vector.shape_cast %151 : vector<1x8x128xbf16> to vector<8x128xbf16>
    %153 = arith.extf %152 : vector<8x128xbf16> to vector<8x128xf32>
    %154 = vector.broadcast %150 : f32 to vector<8x128xf32>
    %155 = arith.mulf %154, %153 : vector<8x128xf32>
    %156 = arith.addf %149, %155 : vector<8x128xf32>
    %c18 = arith.constant 18 : index
    %157 = memref.load %arg1[%c18] : memref<32xf32, #tpu.memory_space<smem>>
    %c2_69 = arith.constant 2 : index
    %c0_70 = arith.constant 0 : index
    %c0_71 = arith.constant 0 : index
    %158 = vector.load %arg3[%c2_69, %c0_70, %c0_71] : memref<8x8x128xbf16, #tpu.memory_space<vmem>>, vector<1x8x128xbf16>
    %159 = vector.shape_cast %158 : vector<1x8x128xbf16> to vector<8x128xbf16>
    %160 = arith.extf %159 : vector<8x128xbf16> to vector<8x128xf32>
    %161 = vector.broadcast %157 : f32 to vector<8x128xf32>
    %162 = arith.mulf %161, %160 : vector<8x128xf32>
    %163 = arith.addf %156, %162 : vector<8x128xf32>
    %c19 = arith.constant 19 : index
    %164 = memref.load %arg1[%c19] : memref<32xf32, #tpu.memory_space<smem>>
    %c3_72 = arith.constant 3 : index
    %c0_73 = arith.constant 0 : index
    %c0_74 = arith.constant 0 : index
    %165 = vector.load %arg3[%c3_72, %c0_73, %c0_74] : memref<8x8x128xbf16, #tpu.memory_space<vmem>>, vector<1x8x128xbf16>
    %166 = vector.shape_cast %165 : vector<1x8x128xbf16> to vector<8x128xbf16>
    %167 = arith.extf %166 : vector<8x128xbf16> to vector<8x128xf32>
    %168 = vector.broadcast %164 : f32 to vector<8x128xf32>
    %169 = arith.mulf %168, %167 : vector<8x128xf32>
    %170 = arith.addf %163, %169 : vector<8x128xf32>
    %c20 = arith.constant 20 : index
    %171 = memref.load %arg1[%c20] : memref<32xf32, #tpu.memory_space<smem>>
    %c4_75 = arith.constant 4 : index
    %c0_76 = arith.constant 0 : index
    %c0_77 = arith.constant 0 : index
    %172 = vector.load %arg3[%c4_75, %c0_76, %c0_77] : memref<8x8x128xbf16, #tpu.memory_space<vmem>>, vector<1x8x128xbf16>
    %173 = vector.shape_cast %172 : vector<1x8x128xbf16> to vector<8x128xbf16>
    %174 = arith.extf %173 : vector<8x128xbf16> to vector<8x128xf32>
    %175 = vector.broadcast %171 : f32 to vector<8x128xf32>
    %176 = arith.mulf %175, %174 : vector<8x128xf32>
    %177 = arith.addf %170, %176 : vector<8x128xf32>
    %c21 = arith.constant 21 : index
    %178 = memref.load %arg1[%c21] : memref<32xf32, #tpu.memory_space<smem>>
    %c5_78 = arith.constant 5 : index
    %c0_79 = arith.constant 0 : index
    %c0_80 = arith.constant 0 : index
    %179 = vector.load %arg3[%c5_78, %c0_79, %c0_80] : memref<8x8x128xbf16, #tpu.memory_space<vmem>>, vector<1x8x128xbf16>
    %180 = vector.shape_cast %179 : vector<1x8x128xbf16> to vector<8x128xbf16>
    %181 = arith.extf %180 : vector<8x128xbf16> to vector<8x128xf32>
    %182 = vector.broadcast %178 : f32 to vector<8x128xf32>
    %183 = arith.mulf %182, %181 : vector<8x128xf32>
    %184 = arith.addf %177, %183 : vector<8x128xf32>
    %c22 = arith.constant 22 : index
    %185 = memref.load %arg1[%c22] : memref<32xf32, #tpu.memory_space<smem>>
    %c6_81 = arith.constant 6 : index
    %c0_82 = arith.constant 0 : index
    %c0_83 = arith.constant 0 : index
    %186 = vector.load %arg3[%c6_81, %c0_82, %c0_83] : memref<8x8x128xbf16, #tpu.memory_space<vmem>>, vector<1x8x128xbf16>
    %187 = vector.shape_cast %186 : vector<1x8x128xbf16> to vector<8x128xbf16>
    %188 = arith.extf %187 : vector<8x128xbf16> to vector<8x128xf32>
    %189 = vector.broadcast %185 : f32 to vector<8x128xf32>
    %190 = arith.mulf %189, %188 : vector<8x128xf32>
    %191 = arith.addf %184, %190 : vector<8x128xf32>
    %c23 = arith.constant 23 : index
    %192 = memref.load %arg1[%c23] : memref<32xf32, #tpu.memory_space<smem>>
    %c7_84 = arith.constant 7 : index
    %c0_85 = arith.constant 0 : index
    %c0_86 = arith.constant 0 : index
    %193 = vector.load %arg3[%c7_84, %c0_85, %c0_86] : memref<8x8x128xbf16, #tpu.memory_space<vmem>>, vector<1x8x128xbf16>
    %194 = vector.shape_cast %193 : vector<1x8x128xbf16> to vector<8x128xbf16>
    %195 = arith.extf %194 : vector<8x128xbf16> to vector<8x128xf32>
    %196 = vector.broadcast %192 : f32 to vector<8x128xf32>
    %197 = arith.mulf %196, %195 : vector<8x128xf32>
    %198 = arith.addf %191, %197 : vector<8x128xf32>
    %199 = arith.addf %137, %198 : vector<8x128xf32>
    %cst_87 = arith.constant 1.000000e+00 : f32
    %200 = vector.broadcast %cst_87 : f32 to vector<8x128xf32>
    %201 = arith.divf %199, %200 : vector<8x128xf32>
    %202 = math.floor %201 : vector<8x128xf32>
    %cst_88 = arith.constant 0.000000e+00 : f32
    %203 = vector.broadcast %cst_88 : f32 to vector<8x128xf32>
    %204 = arith.maximumf %202, %203 : vector<8x128xf32>
    %cst_89 = arith.constant 1.000000e+00 : f32
    %205 = vector.broadcast %cst_89 : f32 to vector<8x128xf32>
    %206 = arith.mulf %204, %205 : vector<8x128xf32>
    %207 = arith.subf %199, %206 : vector<8x128xf32>
    %c2_90 = arith.constant 2 : index
    %c0_91 = arith.constant 0 : index
    %c0_92 = arith.constant 0 : index
    %208 = vector.load %arg4[%c2_90, %c0_91, %c0_92] : memref<4x8x128xf32, #tpu.memory_space<vmem>>, vector<1x8x128xf32>
    %209 = vector.shape_cast %208 : vector<1x8x128xf32> to vector<8x128xf32>
    %210 = vector.shape_cast %204 : vector<8x128xf32> to vector<1x8x128xf32>
    tpu.vector_store %arg4[%c2_90, %c0_91, %c0_92], %210 {strides = array<i32>} : memref<4x8x128xf32, #tpu.memory_space<vmem>>, vector<1x8x128xf32>,
    %c3_93 = arith.constant 3 : index
    %211 = memref.load %arg2[%c3_93] : memref<4xf32, #tpu.memory_space<smem>>
    %212 = vector.broadcast %211 : f32 to vector<8x128xf32>
    %c24 = arith.constant 24 : index
    %213 = memref.load %arg1[%c24] : memref<32xf32, #tpu.memory_space<smem>>
    %c0_94 = arith.constant 0 : index
    %c0_95 = arith.constant 0 : index
    %c0_96 = arith.constant 0 : index
    %214 = vector.load %arg3[%c0_94, %c0_95, %c0_96] : memref<8x8x128xbf16, #tpu.memory_space<vmem>>, vector<1x8x128xbf16>
    %215 = vector.shape_cast %214 : vector<1x8x128xbf16> to vector<8x128xbf16>
    %216 = arith.extf %215 : vector<8x128xbf16> to vector<8x128xf32>
    %217 = vector.broadcast %213 : f32 to vector<8x128xf32>
    %218 = arith.mulf %217, %216 : vector<8x128xf32>
    %219 = arith.addf %212, %218 : vector<8x128xf32>
    %c25 = arith.constant 25 : index
    %220 = memref.load %arg1[%c25] : memref<32xf32, #tpu.memory_space<smem>>
    %c1_97 = arith.constant 1 : index
    %c0_98 = arith.constant 0 : index
    %c0_99 = arith.constant 0 : index
    %221 = vector.load %arg3[%c1_97, %c0_98, %c0_99] : memref<8x8x128xbf16, #tpu.memory_space<vmem>>, vector<1x8x128xbf16>
    %222 = vector.shape_cast %221 : vector<1x8x128xbf16> to vector<8x128xbf16>
    %223 = arith.extf %222 : vector<8x128xbf16> to vector<8x128xf32>
    %224 = vector.broadcast %220 : f32 to vector<8x128xf32>
    %225 = arith.mulf %224, %223 : vector<8x128xf32>
    %226 = arith.addf %219, %225 : vector<8x128xf32>
    %c26 = arith.constant 26 : index
    %227 = memref.load %arg1[%c26] : memref<32xf32, #tpu.memory_space<smem>>
    %c2_100 = arith.constant 2 : index
    %c0_101 = arith.constant 0 : index
    %c0_102 = arith.constant 0 : index
    %228 = vector.load %arg3[%c2_100, %c0_101, %c0_102] : memref<8x8x128xbf16, #tpu.memory_space<vmem>>, vector<1x8x128xbf16>
    %229 = vector.shape_cast %228 : vector<1x8x128xbf16> to vector<8x128xbf16>
    %230 = arith.extf %229 : vector<8x128xbf16> to vector<8x128xf32>
    %231 = vector.broadcast %227 : f32 to vector<8x128xf32>
    %232 = arith.mulf %231, %230 : vector<8x128xf32>
    %233 = arith.addf %226, %232 : vector<8x128xf32>
    %c27 = arith.constant 27 : index
    %234 = memref.load %arg1[%c27] : memref<32xf32, #tpu.memory_space<smem>>
    %c3_103 = arith.constant 3 : index
    %c0_104 = arith.constant 0 : index
    %c0_105 = arith.constant 0 : index
    %235 = vector.load %arg3[%c3_103, %c0_104, %c0_105] : memref<8x8x128xbf16, #tpu.memory_space<vmem>>, vector<1x8x128xbf16>
    %236 = vector.shape_cast %235 : vector<1x8x128xbf16> to vector<8x128xbf16>
    %237 = arith.extf %236 : vector<8x128xbf16> to vector<8x128xf32>
    %238 = vector.broadcast %234 : f32 to vector<8x128xf32>
    %239 = arith.mulf %238, %237 : vector<8x128xf32>
    %240 = arith.addf %233, %239 : vector<8x128xf32>
    %c28 = arith.constant 28 : index
    %241 = memref.load %arg1[%c28] : memref<32xf32, #tpu.memory_space<smem>>
    %c4_106 = arith.constant 4 : index
    %c0_107 = arith.constant 0 : index
    %c0_108 = arith.constant 0 : index
    %242 = vector.load %arg3[%c4_106, %c0_107, %c0_108] : memref<8x8x128xbf16, #tpu.memory_space<vmem>>, vector<1x8x128xbf16>
    %243 = vector.shape_cast %242 : vector<1x8x128xbf16> to vector<8x128xbf16>
    %244 = arith.extf %243 : vector<8x128xbf16> to vector<8x128xf32>
    %245 = vector.broadcast %241 : f32 to vector<8x128xf32>
    %246 = arith.mulf %245, %244 : vector<8x128xf32>
    %247 = arith.addf %240, %246 : vector<8x128xf32>
    %c29 = arith.constant 29 : index
    %248 = memref.load %arg1[%c29] : memref<32xf32, #tpu.memory_space<smem>>
    %c5_109 = arith.constant 5 : index
    %c0_110 = arith.constant 0 : index
    %c0_111 = arith.constant 0 : index
    %249 = vector.load %arg3[%c5_109, %c0_110, %c0_111] : memref<8x8x128xbf16, #tpu.memory_space<vmem>>, vector<1x8x128xbf16>
    %250 = vector.shape_cast %249 : vector<1x8x128xbf16> to vector<8x128xbf16>
    %251 = arith.extf %250 : vector<8x128xbf16> to vector<8x128xf32>
    %252 = vector.broadcast %248 : f32 to vector<8x128xf32>
    %253 = arith.mulf %252, %251 : vector<8x128xf32>
    %254 = arith.addf %247, %253 : vector<8x128xf32>
    %c30 = arith.constant 30 : index
    %255 = memref.load %arg1[%c30] : memref<32xf32, #tpu.memory_space<smem>>
    %c6_112 = arith.constant 6 : index
    %c0_113 = arith.constant 0 : index
    %c0_114 = arith.constant 0 : index
    %256 = vector.load %arg3[%c6_112, %c0_113, %c0_114] : memref<8x8x128xbf16, #tpu.memory_space<vmem>>, vector<1x8x128xbf16>
    %257 = vector.shape_cast %256 : vector<1x8x128xbf16> to vector<8x128xbf16>
    %258 = arith.extf %257 : vector<8x128xbf16> to vector<8x128xf32>
    %259 = vector.broadcast %255 : f32 to vector<8x128xf32>
    %260 = arith.mulf %259, %258 : vector<8x128xf32>
    %261 = arith.addf %254, %260 : vector<8x128xf32>
    %c31 = arith.constant 31 : index
    %262 = memref.load %arg1[%c31] : memref<32xf32, #tpu.memory_space<smem>>
    %c7_115 = arith.constant 7 : index
    %c0_116 = arith.constant 0 : index
    %c0_117 = arith.constant 0 : index
    %263 = vector.load %arg3[%c7_115, %c0_116, %c0_117] : memref<8x8x128xbf16, #tpu.memory_space<vmem>>, vector<1x8x128xbf16>
    %264 = vector.shape_cast %263 : vector<1x8x128xbf16> to vector<8x128xbf16>
    %265 = arith.extf %264 : vector<8x128xbf16> to vector<8x128xf32>
    %266 = vector.broadcast %262 : f32 to vector<8x128xf32>
    %267 = arith.mulf %266, %265 : vector<8x128xf32>
    %268 = arith.addf %261, %267 : vector<8x128xf32>
    %269 = arith.addf %207, %268 : vector<8x128xf32>
    %cst_118 = arith.constant 1.000000e+00 : f32
    %270 = vector.broadcast %cst_118 : f32 to vector<8x128xf32>
    %271 = arith.divf %269, %270 : vector<8x128xf32>
    %272 = math.floor %271 : vector<8x128xf32>
    %cst_119 = arith.constant 0.000000e+00 : f32
    %273 = vector.broadcast %cst_119 : f32 to vector<8x128xf32>
    %274 = arith.maximumf %272, %273 : vector<8x128xf32>
    %c3_120 = arith.constant 3 : index
    %c0_121 = arith.constant 0 : index
    %c0_122 = arith.constant 0 : index
    %275 = vector.load %arg4[%c3_120, %c0_121, %c0_122] : memref<4x8x128xf32, #tpu.memory_space<vmem>>, vector<1x8x128xf32>
    %276 = vector.shape_cast %275 : vector<1x8x128xf32> to vector<8x128xf32>
    %277 = vector.shape_cast %274 : vector<8x128xf32> to vector<1x8x128xf32>
    tpu.vector_store %arg4[%c3_120, %c0_121, %c0_122], %277 {strides = array<i32>} : memref<4x8x128xf32, #tpu.memory_space<vmem>>, vector<1x8x128xf32>,
    return
  }
  func.func @transform_0(%arg0: i32) -> i32 {
    %c0_i32 = arith.constant 0 : i32
    %c0_i32_0 = arith.constant 0 : i32
    return %c0_i32 : i32
  }
  func.func @transform_1(%arg0: i32) -> i32 {
    %c0_i32 = arith.constant 0 : i32
    %c0_i32_0 = arith.constant 0 : i32
    return %c0_i32 : i32
  }
  func.func @transform_2(%arg0: i32) -> (i32, i32, i32) {
    %c0_i32 = arith.constant 0 : i32
    %c0_i32_0 = arith.constant 0 : i32
    %c0_i32_1 = arith.constant 0 : i32
    return %c0_i32, %arg0, %c0_i32_0 : i32, i32, i32
  }
  func.func @transform_3(%arg0: i32) -> (i32, i32, i32) {
    %c0_i32 = arith.constant 0 : i32
    %c0_i32_0 = arith.constant 0 : i32
    %c0_i32_1 = arith.constant 0 : i32
    return %c0_i32, %arg0, %c0_i32_0 : i32, i32, i32
  }
}

</mosaic_0001>

<llo_original>
// kernel: tpu_custom_call.1
$region0: #{tpu_custom_call.1}
  #allocation0 [shape = 'u32[]', space=smem, size = 0x4, offset = 0x4, fixed_abs, tag = 'smem constant byte address 0x4 - core index']
  #allocation1 [shape = 'u32[144,128]{1,0:T(1,128)}', space=vmem, size = 0x12000, scoped, tag = 'internal scratch']
  %s0 = inlined_call_operand.hbm [shape: f32[32], index: 0, kind: input, shape index: {}]
  %s1 = inlined_call_operand.vmem [shape: f32[4], index: 1, kind: input, shape index: {}]
  %s2 = inlined_call_operand.hbm [shape: bf16[8,8,128], index: 2, kind: input, shape index: {}]
  %s3 = inlined_call_operand.hbm [shape: f32[4,8,128], index: 3, kind: output, shape index: {}]
  %s4 = sld [smem:[#allocation0]]
  $region34: #{tpu_custom_call.1} parent=0
    _
  %s6 = ssub.s32 1, %s4
  %s7 = scalar_select 0, %s6, %s4
  $region1: #{tpu_custom_call.1} parent=0
    #allocation2 [shape = 'u8[512]{0}', space=smem, size = 0x200, scoped, tag = 'input window, operand 0, single buffered']
    #allocation3 [shape = 's32[1]{0}', space=sflag, size = 0x4, scoped, tag = 'scoped memory for tpu_custom_call.1']
    #allocation4 [shape = 's32[1]{0}', space=sflag, size = 0x4, scoped, tag = 'scoped memory for tpu_custom_call.1']
    #allocation5 [shape = 's32[1]{0}', space=sflag, size = 0x4, scoped, tag = 'scoped memory for tpu_custom_call.1']
    #allocation6 [shape = 's32[1]{0}', space=sflag, size = 0x4, scoped, tag = 'scoped memory for tpu_custom_call.1']
    #allocation7 [shape = 'u8[512]{0}', space=smem, size = 0x200, scoped, tag = 'input window, operand 1, single buffered']
    #allocation8 [shape = 'u8[16384]{0}', space=vmem, size = 0x4000, scoped, tag = 'input window, operand 2, single buffered']
    #allocation9 [shape = 'u8[16384]{0}', space=vmem, size = 0x4000, scoped, tag = 'output window, operand 0, single buffered']
    %8 = vsyncpa [#allocation5], 0
    %9 = vsyncpa [#allocation6], 0
    %10 = vsyncpa [#allocation3], 0
    %11 = vsyncpa [#allocation4], 0
    // Predicated region
    $region2: #{tpu_custom_call.1} parent=1 // pred_check
      _
    $region3: #{tpu_custom_call.1} parent=1 // pred_check_branch
      %13 = sbr.rel (0) target = $region5
    $region4: #{tpu_custom_call.1} parent=1 // pred_region
      %s15 = ssub.s32 16, 16
      %16 = vsyncadd [#allocation5], %s15
      %19 = dma.hbm_to_smem %s0, 16, [#allocation2], [#allocation5]
    $region5: #{tpu_custom_call.1} parent=1 // pred_fallthru
      _
    // Predicated region
    $region6: #{tpu_custom_call.1} parent=1 // pred_check
      _
    $region7: #{tpu_custom_call.1} parent=1 // pred_check_branch
      %21 = sbr.rel (0) target = $region9
    $region8: #{tpu_custom_call.1} parent=1 // pred_region
      %s23 = ssub.s32 16, 16
      %24 = vsyncadd [#allocation6], %s23
      %s26 = sshll.u32 %s1, 4
      %s27 = int_to_ptr.vmem [resolvable:$true] %s26
      %29 = dma.vmem_to_smem %s27, 16, [#allocation7], [#allocation6]
    $region9: #{tpu_custom_call.1} parent=1 // pred_fallthru
      _
    // Predicated region
    $region10: #{tpu_custom_call.1} parent=1 // pred_check
      _
    $region11: #{tpu_custom_call.1} parent=1 // pred_check_branch
      %31 = sbr.rel (0) target = $region13
    $region12: #{tpu_custom_call.1} parent=1 // pred_region
      %s33 = ssub.s32 512, 512
      %34 = vsyncadd [#allocation3], %s33
      %s35 = sshll.u32 [#allocation8], 4
      %s36 = int_to_ptr.vmem [resolvable:$true] %s35
      %41 = dma.hbm_to_vmem [thread:$0]  %s2, 512, %s36, [#allocation3], 64, 64, 4
    $region13: #{tpu_custom_call.1} parent=1 // pred_fallthru
      _
    // Predicated region
    $region14: #{tpu_custom_call.1} parent=1 // pred_check
      _
    $region15: #{tpu_custom_call.1} parent=1 // pred_check_branch
      %43 = sbr.rel (0) target = $region17
    $region16: #{tpu_custom_call.1} parent=1 // pred_region
      %44 = dma.done [#allocation5], 16
    $region17: #{tpu_custom_call.1} parent=1 // pred_fallthru
      _
    // Predicated region
    $region18: #{tpu_custom_call.1} parent=1 // pred_check
      _
    $region19: #{tpu_custom_call.1} parent=1 // pred_check_branch
      %46 = sbr.rel (0) target = $region21
    $region20: #{tpu_custom_call.1} parent=1 // pred_region
      %47 = dma.done [#allocation6], 16
    $region21: #{tpu_custom_call.1} parent=1 // pred_fallthru
      _
    // Predicated region
    $region22: #{tpu_custom_call.1} parent=1 // pred_check
      _
    $region23: #{tpu_custom_call.1} parent=1 // pred_check_branch
      %49 = sbr.rel (0) target = $region25
    $region24: #{tpu_custom_call.1} parent=1 // pred_region
      %50 = dma.done [#allocation3], 512
    $region25: #{tpu_custom_call.1} parent=1 // pred_fallthru
      _
    %51 = sfence
    %s52 = sld [smem:[#allocation7]]
    %v53 = vstv %s52
    %s54 = sld [smem:[#allocation2]]
    %v55 = vld [vmem:[#allocation8] sm:$0xf]
    %v56 = vunpack.c.l.bf16 %v55
    %v57 = vstv %s54
    %v58 = vmul.f32 %v57, %v56
    %v59 = vadd.f32 %v53, %v58
    %s60 = sld [smem:[#allocation2 + $0x1]]
    %s61 = scalar_lea.vmem [#allocation8], 4
    %v62 = vld [vmem:[%s61] sm:$0xf]
    %v63 = vunpack.c.l.bf16 %v62
    %v64 = vstv %s60
    %v65 = vmul.f32 %v64, %v63
    %v66 = vadd.f32 %v59, %v65
    %s67 = sld [smem:[#allocation2 + $0x2]]
    %s68 = scalar_lea.vmem [#allocation8], 8
    %v69 = vld [vmem:[%s68] sm:$0xf]
    %v70 = vunpack.c.l.bf16 %v69
    %v71 = vstv %s67
    %v72 = vmul.f32 %v71, %v70
    %v73 = vadd.f32 %v66, %v72
    %s74 = sld [smem:[#allocation2 + $0x3]]
    %s75 = scalar_lea.vmem [#allocation8], 12
    %v76 = vld [vmem:[%s75] sm:$0xf]
    %v77 = vunpack.c.l.bf16 %v76
    %v78 = vstv %s74
    %v79 = vmul.f32 %v78, %v77
    %v80 = vadd.f32 %v73, %v79
    %s81 = sld [smem:[#allocation2 + $0x4]]
    %s82 = scalar_lea.vmem [#allocation8], 16
    %v83 = vld [vmem:[%s82] sm:$0xf]
    %v84 = vunpack.c.l.bf16 %v83
    %v85 = vstv %s81
    %v86 = vmul.f32 %v85, %v84
    %v87 = vadd.f32 %v80, %v86
    %s88 = sld [smem:[#allocation2 + $0x5]]
    %s89 = scalar_lea.vmem [#allocation8], 20
    %v90 = vld [vmem:[%s89] sm:$0xf]
    %v91 = vunpack.c.l.bf16 %v90
    %v92 = vstv %s88
    %v93 = vmul.f32 %v92, %v91
    %v94 = vadd.f32 %v87, %v93
    %s95 = sld [smem:[#allocation2 + $0x6]]
    %s96 = scalar_lea.vmem [#allocation8], 24
    %v97 = vld [vmem:[%s96] sm:$0xf]
    %v98 = vunpack.c.l.bf16 %v97
    %v99 = vstv %s95
    %v100 = vmul.f32 %v99, %v98
    %v101 = vadd.f32 %v94, %v100
    %s102 = sld [smem:[#allocation2 + $0x7]]
    %s103 = scalar_lea.vmem [#allocation8], 28
    %v104 = vld [vmem:[%s103] sm:$0xf]
    %v105 = vunpack.c.l.bf16 %v104
    %v106 = vstv %s102
    %v107 = vmul.f32 %v106, %v105
    %v108 = vadd.f32 %v101, %v107
    %v109 = vadd.f32 %v108, 0.0
    %v110 = vfloor.f32 %v109
    %v111 = vmax.f32 %v110, 0.0
    %v112 = vsub.f32 %v109, %v111
    %113 = vst [vmem:[#allocation9] sm:$0xff] %v111
    %s114 = sld [smem:[#allocation7 + $0x1]]
    %v115 = vstv %s114
    %s116 = sld [smem:[#allocation2 + $0x8]]
    %v117 = vld [vmem:[#allocation8] sm:$0xf]
    %v118 = vunpack.c.l.bf16 %v117
    %v119 = vstv %s116
    %v120 = vmul.f32 %v119, %v118
    %v121 = vadd.f32 %v115, %v120
    %s122 = sld [smem:[#allocation2 + $0x9]]
    %v123 = vld [vmem:[%s61] sm:$0xf]
    %v124 = vunpack.c.l.bf16 %v123
    %v125 = vstv %s122
    %v126 = vmul.f32 %v125, %v124
    %v127 = vadd.f32 %v121, %v126
    %s128 = sld [smem:[#allocation2 + $0xa]]
    %v129 = vld [vmem:[%s68] sm:$0xf]
    %v130 = vunpack.c.l.bf16 %v129
    %v131 = vstv %s128
    %v132 = vmul.f32 %v131, %v130
    %v133 = vadd.f32 %v127, %v132
    %s134 = sld [smem:[#allocation2 + $0xb]]
    %v135 = vld [vmem:[%s75] sm:$0xf]
    %v136 = vunpack.c.l.bf16 %v135
    %v137 = vstv %s134
    %v138 = vmul.f32 %v137, %v136
    %v139 = vadd.f32 %v133, %v138
    %s140 = sld [smem:[#allocation2 + $0xc]]
    %v141 = vld [vmem:[%s82] sm:$0xf]
    %v142 = vunpack.c.l.bf16 %v141
    %v143 = vstv %s140
    %v144 = vmul.f32 %v143, %v142
    %v145 = vadd.f32 %v139, %v144
    %s146 = sld [smem:[#allocation2 + $0xd]]
    %v147 = vld [vmem:[%s89] sm:$0xf]
    %v148 = vunpack.c.l.bf16 %v147
    %v149 = vstv %s146
    %v150 = vmul.f32 %v149, %v148
    %v151 = vadd.f32 %v145, %v150
    %s152 = sld [smem:[#allocation2 + $0xe]]
    %v153 = vld [vmem:[%s96] sm:$0xf]
    %v154 = vunpack.c.l.bf16 %v153
    %v155 = vstv %s152
    %v156 = vmul.f32 %v155, %v154
    %v157 = vadd.f32 %v151, %v156
    %s158 = sld [smem:[#allocation2 + $0xf]]
    %v159 = vld [vmem:[%s103] sm:$0xf]
    %v160 = vunpack.c.l.bf16 %v159
    %v161 = vstv %s158
    %v162 = vmul.f32 %v161, %v160
    %v163 = vadd.f32 %v157, %v162
    %v164 = vadd.f32 %v112, %v163
    %v165 = vfloor.f32 %v164
    %v166 = vmax.f32 %v165, 0.0
    %v167 = vsub.f32 %v164, %v166
    %s168 = scalar_lea.vmem [#allocation9], 8
    %169 = vst [vmem:[%s168] sm:$0xff] %v166
    %s170 = sld [smem:[#allocation7 + $0x2]]
    %v171 = vstv %s170
    %s172 = sld [smem:[#allocation2 + $0x10]]
    %v173 = vld [vmem:[#allocation8] sm:$0xf]
    %v174 = vunpack.c.l.bf16 %v173
    %v175 = vstv %s172
    %v176 = vmul.f32 %v175, %v174
    %v177 = vadd.f32 %v171, %v176
    %s178 = sld [smem:[#allocation2 + $0x11]]
    %v179 = vld [vmem:[%s61] sm:$0xf]
    %v180 = vunpack.c.l.bf16 %v179
    %v181 = vstv %s178
    %v182 = vmul.f32 %v181, %v180
    %v183 = vadd.f32 %v177, %v182
    %s184 = sld [smem:[#allocation2 + $0x12]]
    %v185 = vld [vmem:[%s68] sm:$0xf]
    %v186 = vunpack.c.l.bf16 %v185
    %v187 = vstv %s184
    %v188 = vmul.f32 %v187, %v186
    %v189 = vadd.f32 %v183, %v188
    %s190 = sld [smem:[#allocation2 + $0x13]]
    %v191 = vld [vmem:[%s75] sm:$0xf]
    %v192 = vunpack.c.l.bf16 %v191
    %v193 = vstv %s190
    %v194 = vmul.f32 %v193, %v192
    %v195 = vadd.f32 %v189, %v194
    %s196 = sld [smem:[#allocation2 + $0x14]]
    %v197 = vld [vmem:[%s82] sm:$0xf]
    %v198 = vunpack.c.l.bf16 %v197
    %v199 = vstv %s196
    %v200 = vmul.f32 %v199, %v198
    %v201 = vadd.f32 %v195, %v200
    %s202 = sld [smem:[#allocation2 + $0x15]]
    %v203 = vld [vmem:[%s89] sm:$0xf]
    %v204 = vunpack.c.l.bf16 %v203
    %v205 = vstv %s202
    %v206 = vmul.f32 %v205, %v204
    %v207 = vadd.f32 %v201, %v206
    %s208 = sld [smem:[#allocation2 + $0x16]]
    %v209 = vld [vmem:[%s96] sm:$0xf]
    %v210 = vunpack.c.l.bf16 %v209
    %v211 = vstv %s208
    %v212 = vmul.f32 %v211, %v210
    %v213 = vadd.f32 %v207, %v212
    %s214 = sld [smem:[#allocation2 + $0x17]]
    %v215 = vld [vmem:[%s103] sm:$0xf]
    %v216 = vunpack.c.l.bf16 %v215
    %v217 = vstv %s214
    %v218 = vmul.f32 %v217, %v216
    %v219 = vadd.f32 %v213, %v218
    %v220 = vadd.f32 %v167, %v219
    %v221 = vfloor.f32 %v220
    %v222 = vmax.f32 %v221, 0.0
    %v223 = vsub.f32 %v220, %v222
    %s224 = scalar_lea.vmem [#allocation9], 16
    %225 = vst [vmem:[%s224] sm:$0xff] %v222
    %s226 = sld [smem:[#allocation7 + $0x3]]
    %v227 = vstv %s226
    %s228 = sld [smem:[#allocation2 + $0x18]]
    %v229 = vld [vmem:[#allocation8] sm:$0xf]
    %v230 = vunpack.c.l.bf16 %v229
    %v231 = vstv %s228
    %v232 = vmul.f32 %v231, %v230
    %v233 = vadd.f32 %v227, %v232
    %s234 = sld [smem:[#allocation2 + $0x19]]
    %v235 = vld [vmem:[%s61] sm:$0xf]
    %v236 = vunpack.c.l.bf16 %v235
    %v237 = vstv %s234
    %v238 = vmul.f32 %v237, %v236
    %v239 = vadd.f32 %v233, %v238
    %s240 = sld [smem:[#allocation2 + $0x1a]]
    %v241 = vld [vmem:[%s68] sm:$0xf]
    %v242 = vunpack.c.l.bf16 %v241
    %v243 = vstv %s240
    %v244 = vmul.f32 %v243, %v242
    %v245 = vadd.f32 %v239, %v244
    %s246 = sld [smem:[#allocation2 + $0x1b]]
    %v247 = vld [vmem:[%s75] sm:$0xf]
    %v248 = vunpack.c.l.bf16 %v247
    %v249 = vstv %s246
    %v250 = vmul.f32 %v249, %v248
    %v251 = vadd.f32 %v245, %v250
    %s252 = sld [smem:[#allocation2 + $0x1c]]
    %v253 = vld [vmem:[%s82] sm:$0xf]
    %v254 = vunpack.c.l.bf16 %v253
    %v255 = vstv %s252
    %v256 = vmul.f32 %v255, %v254
    %v257 = vadd.f32 %v251, %v256
    %s258 = sld [smem:[#allocation2 + $0x1d]]
    %v259 = vld [vmem:[%s89] sm:$0xf]
    %v260 = vunpack.c.l.bf16 %v259
    %v261 = vstv %s258
    %v262 = vmul.f32 %v261, %v260
    %v263 = vadd.f32 %v257, %v262
    %s264 = sld [smem:[#allocation2 + $0x1e]]
    %v265 = vld [vmem:[%s96] sm:$0xf]
    %v266 = vunpack.c.l.bf16 %v265
    %v267 = vstv %s264
    %v268 = vmul.f32 %v267, %v266
    %v269 = vadd.f32 %v263, %v268
    %s270 = sld [smem:[#allocation2 + $0x1f]]
    %v271 = vld [vmem:[%s103] sm:$0xf]
    %v272 = vunpack.c.l.bf16 %v271
    %v273 = vstv %s270
    %v274 = vmul.f32 %v273, %v272
    %v275 = vadd.f32 %v269, %v274
    %v276 = vadd.f32 %v223, %v275
    %v277 = vfloor.f32 %v276
    %v278 = vmax.f32 %v277, 0.0
    %s279 = scalar_lea.vmem [#allocation9], 24
    %280 = vst [vmem:[%s279] sm:$0xff] %v278
    // Predicated region
    $region26: #{tpu_custom_call.1} parent=1 // pred_check
      _
    $region27: #{tpu_custom_call.1} parent=1 // pred_check_branch
      %282 = sbr.rel (0) target = $region29
    $region28: #{tpu_custom_call.1} parent=1 // pred_region
      %s284 = ssub.s32 512, 512
      %285 = vsyncadd [#allocation4], %s284
      %s286 = sshll.u32 [#allocation9], 4
      %s287 = int_to_ptr.vmem [resolvable:$true] %s286
      %292 = dma.vmem_to_hbm [thread:$0]  %s287, 512, %s3, [#allocation4], 128, 128, 8
    $region29: #{tpu_custom_call.1} parent=1 // pred_fallthru
      _
    // Predicated region
    $region30: #{tpu_custom_call.1} parent=1 // pred_check
      _
    $region31: #{tpu_custom_call.1} parent=1 // pred_check_branch
      %294 = sbr.rel (0) target = $region33
    $region32: #{tpu_custom_call.1} parent=1 // pred_region
      %295 = dma.done [#allocation4], 512
    $region33: #{tpu_custom_call.1} parent=1 // pred_fallthru
      _
    %296 = vsyncpa [#allocation3], 1
    %297 = vsyncpa [#allocation4], 1
    %298 = vsyncpa [#allocation5], 1
    %299 = vsyncpa [#allocation6], 1

</llo_original>
